<compile_context>
chip_gen: v5e
topology: v5e:2x2
jax: 0.10.0
libtpu: 0.0.40
codegen_flags: <defaults>
</compile_context>

<pallas_src>
import functools
import math

import jax
import jax.numpy as jnp
from jax.experimental import pallas as pl
from jax.experimental.pallas import tpu as pltpu


def _round_up(x, m):
    return -(-x // m) * m


def _vmem_capacity_bytes():
    try:
        cap = int(pltpu.get_tpu_info().vmem_capacity_bytes)
        if cap > 0:
            return cap
    except Exception:
        pass
    return 64 * 1024 * 1024            # conservative: v7x per-TensorCore VMEM


# ---------------------------------------------------------------------------
# Pallas kernel: one (batch, row-band) step of the fused masked conv.
# ---------------------------------------------------------------------------
def _sparse_conv_kernel(x_lo_ref, x_hi_ref, w_ref, b_ref, o_ref, x_stage,
                        *, kh_sz, kw_sz, w_cols, t_rows):
    """Dense (stride-1) correlation for t_rows image rows of one batch element.

    x_lo_ref : (1, t_rows*w_cols, C)      flattened (row-major H,W) input slab
    x_hi_ref : (1, halo*w_cols,  C)       rows just below the slab (bottom taps)
    w_ref    : (KH*KW*C, OC_pad)          masked weight, im2col column order
    b_ref    : (1, OC_pad)                bias (zeros if the layer has none)
    o_ref    : (1, t_rows*w_cols, OC_pad) output band tile
    x_stage  : VMEM ((t_rows+halo)*w_cols, C) staging buffer (slab + halo)
    """
    m = t_rows * w_cols
    halo_m = x_hi_ref.shape[1]

    # Stage slab + halo contiguously so every shifted tap view is a plain
    # static 2D slice, even when its rows straddle the slab boundary.
    x_stage[0:m, :] = x_lo_ref[0]
    x_stage[m:m + halo_m, :] = x_hi_ref[0]

    # Fused im2col: concatenate the KH*KW shifted views along the lane dim so
    # the MXU sees one contraction of depth KH*KW*C instead of KH*KW separate
    # K=C matmuls plus KH*KW f32 accumulator passes.
    taps = []
    for kh in range(kh_sz):
        for kw in range(kw_sz):
            off = kh * w_cols + kw                      # static offset
            taps.append(x_stage[off:off + m, :])        # (m, C)
    patch = taps[0] if len(taps) == 1 else jnp.concatenate(taps, axis=-1)

    acc = jnp.dot(patch, w_ref[...], preferred_element_type=jnp.float32)
    # Bias folded into the single finalize store.
    o_ref[0, :, :] = (acc + b_ref[...]).astype(o_ref.dtype)


# ---------------------------------------------------------------------------
# Tiling / VMEM planning helpers.
# ---------------------------------------------------------------------------
def _halo_rows_for(t_rows, kh, w_cols):
    """Smallest divisor of t_rows covering the KH-1 row halo whose block keeps
    the sublane dim a multiple of 8."""
    for d in range(max(kh, 1), t_rows + 1):
        if t_rows % d == 0 and (d * w_cols) % 8 == 0:
            return d
    return t_rows


def _step_vmem_bytes(t_rows, halo_rows, w_cols, c, ktot, oc_pad, in_isz, out_isz):
    """Per-grid-step VMEM footprint: double-buffered pipeline blocks + scratch
    + the kernel's main temporaries."""
    m = t_rows * w_cols
    hm = halo_rows * w_cols
    return (2 * m * c * in_isz            # main slab (x2 pipeline buffers)
            + 2 * hm * c * in_isz         # halo slab
            + 2 * ktot * oc_pad * in_isz  # packed weight (constant block)
            + 2 * oc_pad * 4              # bias
            + 2 * m * oc_pad * out_isz    # output band tile
            + (m + hm) * c * in_isz       # staging scratch
            + m * ktot * in_isz           # im2col patch (vregs / VMEM temp)
            + m * oc_pad * 4)             # f32 accumulator temp


def _pick_row_tile(r_need, w_cols, c, ktot, oc_pad, kh, row_align,
                   in_isz, out_isz, budget):
    """Largest aligned image-row tile whose per-step footprint fits `budget`,
    targeting up to ~4K flattened M rows per step."""
    t = min(r_need, max(1, 4096 // w_cols))
    t = _round_up(max(t, kh, row_align), row_align)
    while True:
        halo = _halo_rows_for(t, kh, w_cols)
        if _step_vmem_bytes(t, halo, w_cols, c, ktot, oc_pad,
                            in_isz, out_isz) <= budget:
            break
        t_new = _round_up(max(t // 2, kh, row_align), row_align)
        if t_new >= t:
            break
        t = t_new
    return t


# ---------------------------------------------------------------------------
# Weight / bias preparation (hoist out of the hot path per weight update).
# ---------------------------------------------------------------------------
def prepare_sparse_conv_weights(weight_oihw, mask_oihw, bias, oc_pad,
                                compute_dtype=jnp.bfloat16):
    """(weight*mask) -> (KH*KW*C, OC_pad) im2col weight; bias -> (1, OC_pad)."""
    oc, c, kh, kw = weight_oihw.shape
    w = (weight_oihw * mask_oihw).astype(compute_dtype)
    # (OC,C,KH,KW) -> (KH,KW,C,OC) -> (KH*KW*C, OC): tap-major, C fastest,
    # matching the in-kernel patch column order.
    w_packed = jnp.transpose(w, (2, 3, 1, 0)).reshape(kh * kw * c, oc)
    w_packed = jnp.pad(w_packed, ((0, 0), (0, oc_pad - oc)))
    if bias is None:
        b_pad = jnp.zeros((1, oc_pad), jnp.float32)
    else:
        b_pad = jnp.pad(bias.astype(jnp.float32),
                        (0, oc_pad - oc)).reshape(1, oc_pad)
    return w_packed, b_pad


# ---------------------------------------------------------------------------
# SparseConv2d forward: conv2d(x, weight * mask, bias, stride, padding).
# ---------------------------------------------------------------------------
def sparse_conv2d_forward(x_nchw, weight_oihw, mask_oihw, bias=None, *,
                          stride=1, padding=0, row_tile=None,
                          compute_dtype=jnp.bfloat16, band_dtype=None):
    n, c, h, w_in = x_nchw.shape
    oc, ic, kh, kw = weight_oihw.shape
    assert ic == c, (ic, c)

    oh = (h + 2 * padding - kh) // stride + 1
    ow = (w_in + 2 * padding - kw) // stride + 1
    assert oh > 0 and ow > 0, (oh, ow)

    out_dtype = x_nchw.dtype
    band_dtype = out_dtype if band_dtype is None else band_dtype
    oc_pad = _round_up(oc, 128)          # lane-dense output / full MXU N dim
    w_cols = w_in + 2 * padding
    ktot = kh * kw * c                   # folded contraction depth

    # Dense (stride-1) rows required so the subsampled output covers [0, oh).
    r_need = (oh - 1) * stride + 1

    in_isz = jnp.dtype(compute_dtype).itemsize
    out_isz = jnp.dtype(band_dtype).itemsize
    row_align = 8 // math.gcd(w_cols, 8)             # (8,128) rule on t*w_cols

    vmem_cap = _vmem_capacity_bytes()
    # Headroom for Mosaic-internal scratch; tighter on small-VMEM parts (v7x
    # 64 MiB/TC) than on v5e/v6e (128 MiB).
    tile_budget = int(vmem_cap * (0.40 if vmem_cap <= 64 * 1024 * 1024 else 0.50))

    if row_tile is None:
        t_rows = _pick_row_tile(r_need, w_cols, c, ktot, oc_pad, kh, row_align,
                                in_isz, out_isz, tile_budget)
    else:
        t_rows = _round_up(max(row_tile, kh, row_align), row_align)

    m_band = t_rows * w_cols
    num_tiles = pl.cdiv(r_need, t_rows)
    rows_total = max((num_tiles + 1) * t_rows,
                     _round_up(h + 2 * padding, t_rows))

    halo_rows = _halo_rows_for(t_rows, kh, w_cols)
    halo_m = halo_rows * w_cols
    halo_q = t_rows // halo_rows            # halo block index stride

    footprint = _step_vmem_bytes(t_rows, halo_rows, w_cols, c, ktot, oc_pad,
                                 in_isz, out_isz)
    vmem_limit = int(min(0.9 * vmem_cap,
                         max(32 * 1024 * 1024, 1.5 * footprint + (4 << 20))))

    # Weights / bias (hoistable glue; cheap relative to activations).
    w_packed, b_pad = prepare_sparse_conv_weights(
        weight_oihw, mask_oihw, bias, oc_pad, compute_dtype)

    # NCHW -> NHWC, single spatial zero-pad pass, flatten (H, W) -> band rows.
    # TODO(synk): keep activations NHWC across layers / allow_input_fusion to
    #             drop this glue HBM round trip.
    x = jnp.transpose(x_nchw, (0, 2, 3, 1)).astype(compute_dtype)
    x = jnp.pad(x, ((0, 0),
                    (padding, rows_total - h - padding),
                    (padding, padding),
                    (0, 0)))
    x = x.reshape(n, rows_total * w_cols, c)

    kernel = functools.partial(_sparse_conv_kernel, kh_sz=kh, kw_sz=kw,
                               w_cols=w_cols, t_rows=t_rows)

    band = pl.pallas_call(
        kernel,
        out_shape=jax.ShapeDtypeStruct((n, num_tiles * m_band, oc_pad),
                                       band_dtype),
        grid_spec=pltpu.PrefetchScalarGridSpec(
            num_scalar_prefetch=0,
            grid=(n, num_tiles),
            in_specs=[
                # main slab
                pl.BlockSpec((1, m_band, c), lambda b, t: (b, t, 0)),
                # halo slab: the rows just below the main slab
                pl.BlockSpec((1, halo_m, c),
                             lambda b, t: (b, (t + 1) * halo_q, 0)),
                # folded masked weight (constant block -> stays resident)
                pl.BlockSpec((ktot, oc_pad), lambda b, t: (0, 0)),
                # bias
                pl.BlockSpec((1, oc_pad), lambda b, t: (0, 0)),
            ],
            out_specs=pl.BlockSpec((1, m_band, oc_pad),
                                   lambda b, t: (b, t, 0)),
            scratch_shapes=[pltpu.VMEM((m_band + halo_m, c), compute_dtype)],
        ),
        compiler_params=pltpu.CompilerParams(
            dimension_semantics=("parallel", "parallel"),
            vmem_limit_bytes=vmem_limit),
    )(x, x, w_packed, b_pad)

    # band[b, i*w_cols + j, :] is the dense correlation at input offset (i, j);
    # subsample by stride, crop the wrap-around columns and the OC padding.
    band = band.reshape(n, num_tiles * t_rows, w_cols, oc_pad)
    out = band[:, 0:r_need:stride, 0:(ow - 1) * stride + 1:stride, :oc]
    out = out.astype(out_dtype)
    return jnp.transpose(out, (0, 3, 1, 2))                    # back to NCHW


# ---------------------------------------------------------------------------
# Deterministic parameter init (mirrors SparseConv2d.reset_parameters).
# ---------------------------------------------------------------------------
def init_sparse_conv2d(key, in_channels, out_channels, kernel_size, bias=True):
    k_w, k_b = jax.random.split(key)
    fan_in = in_channels * kernel_size * kernel_size
    # kaiming_uniform_(a=sqrt(5)) -> bound = sqrt(1 / fan_in)
    bound = (1.0 / fan_in) ** 0.5
    weight = jax.random.uniform(
        k_w, (out_channels, in_channels, kernel_size, kernel_size),
        minval=-bound, maxval=bound, dtype=jnp.float32)
    mask = jnp.ones_like(weight)          # requires_grad=False, ones by default
    b = (jax.random.uniform(k_b, (out_channels,), minval=-0.1, maxval=0.1,
                            dtype=jnp.float32) if bias else None)
    return weight, mask, b


if __name__ == "__main__":
    key = jax.random.PRNGKey(0)
    kx, kp, km = jax.random.split(key, 3)

    # Small synthetic shapes consistent with the module.
    N, C, H, W = 2, 4, 16, 16
    OC, KS = 8, 3

    x = jax.random.normal(kx, (N, C, H, W), dtype=jnp.float32)
    weight, mask, bias = init_sparse_conv2d(kp, C, OC, KS, bias=True)
    # Make the sparsity mask non-trivial (~50% zeros).
    mask = (jax.random.uniform(km, mask.shape) > 0.5).astype(jnp.float32)

    def run_and_check(stride, padding, b, row_tile, band_dtype=None, tol=1e-3):
        fwd = jax.jit(functools.partial(
            sparse_conv2d_forward, stride=stride, padding=padding,
            row_tile=row_tile, band_dtype=band_dtype))
        out = fwd(x, weight, mask, b)
        jax.block_until_ready(out)

        # Reference: XLA conv on the same bf16-rounded operands, f32 math.
        xb = x.astype(jnp.bfloat16).astype(jnp.float32)
        wb = (weight * mask).astype(jnp.bfloat16).astype(jnp.float32)
        ref = jax.lax.conv_general_dilated(
            xb, wb, window_strides=(stride, stride),
            padding=[(padding, padding), (padding, padding)],
            dimension_numbers=("NCHW", "OIHW", "NCHW"),
            precision=jax.lax.Precision.HIGHEST)
        if b is not None:
            ref = ref + b.reshape(1, -1, 1, 1)

        assert out.shape == ref.shape, (out.shape, ref.shape)
        err = float(jnp.max(jnp.abs(out - ref)))
        assert err < tol, (err, tol)
        return out

    # (a) padding=1, bias, small row tile -> multi-tile grid + halo path.
    run_and_check(1, 1, bias, row_tile=8)
    # (b) padding=0, no bias, auto row tile, bf16 band writeback.
    run_and_check(1, 0, None, row_tile=None, band_dtype=jnp.bfloat16, tol=3e-2)
    # (c) stride=2 path (dense band computed in-kernel, subsampled in glue).
    run_and_check(2, 1, bias, row_tile=None)

    print("KERNEL_OK")
</pallas_src>

<mosaic_0001>
module attributes {stable_mosaic.version = 11 : i64} {
  func.func @_sparse_conv_kernel(%arg0: i32, %arg1: i32, %arg2: memref<1x144x4xbf16, #tpu.memory_space<vmem>>, %arg3: memref<1x72x4xbf16, #tpu.memory_space<vmem>>, %arg4: memref<36x128xbf16, #tpu.memory_space<vmem>>, %arg5: memref<1x128xf32, #tpu.memory_space<vmem>>, %arg6: memref<1x144x128xf32, #tpu.memory_space<vmem>>, %arg7: memref<216x4xbf16, #tpu.memory_space<vmem>>) attributes {dimension_semantics = [#tpu.dimension_semantics<parallel>, #tpu.dimension_semantics<parallel>], iteration_bounds = array<i64: 2, 2>, scalar_prefetch = 0 : i64, scratch_operands = 1 : i64, tpu.core_type = #tpu.core_type<tc>, window_params = [{transform_indices = @transform_0, window_bounds = array<i64: 1, 144, 4>}, {transform_indices = @transform_1, window_bounds = array<i64: 1, 72, 4>}, {pipeline_mode = #tpu.pipeline_mode<synchronous>, transform_indices = @transform_2, window_bounds = array<i64: 36, 128>}, {pipeline_mode = #tpu.pipeline_mode<synchronous>, transform_indices = @transform_3, window_bounds = array<i64: 1, 128>}, {transform_indices = @transform_4, window_bounds = array<i64: 1, 144, 128>}]} {
    %c0 = arith.constant 0 : index
    %c0_0 = arith.constant 0 : index
    %c0_1 = arith.constant 0 : index
    %0 = vector.load %arg2[%c0, %c0_0, %c0_1] : memref<1x144x4xbf16, #tpu.memory_space<vmem>>, vector<1x144x4xbf16>
    %1 = vector.shape_cast %0 : vector<1x144x4xbf16> to vector<144x4xbf16>
    %c0_2 = arith.constant 0 : index
    %c0_3 = arith.constant 0 : index
    %2 = vector.load %arg7[%c0_2, %c0_3] : memref<216x4xbf16, #tpu.memory_space<vmem>>, vector<144x4xbf16>
    tpu.vector_store %arg7[%c0_2, %c0_3], %1 {strides = array<i32>} : memref<216x4xbf16, #tpu.memory_space<vmem>>, vector<144x4xbf16>,
    %c0_4 = arith.constant 0 : index
    %c0_5 = arith.constant 0 : index
    %c0_6 = arith.constant 0 : index
    %3 = vector.load %arg3[%c0_4, %c0_5, %c0_6] : memref<1x72x4xbf16, #tpu.memory_space<vmem>>, vector<1x72x4xbf16>
    %4 = vector.shape_cast %3 : vector<1x72x4xbf16> to vector<72x4xbf16>
    %c144 = arith.constant 144 : index
    %c0_7 = arith.constant 0 : index
    %5 = vector.load %arg7[%c144, %c0_7] : memref<216x4xbf16, #tpu.memory_space<vmem>>, vector<72x4xbf16>
    tpu.vector_store %arg7[%c144, %c0_7], %4 {strides = array<i32>} : memref<216x4xbf16, #tpu.memory_space<vmem>>, vector<72x4xbf16>,
    %c0_8 = arith.constant 0 : index
    %c0_9 = arith.constant 0 : index
    %6 = vector.load %arg7[%c0_8, %c0_9] : memref<216x4xbf16, #tpu.memory_space<vmem>>, vector<144x4xbf16>
    %c1 = arith.constant 1 : index
    %c0_10 = arith.constant 0 : index
    %7 = vector.load %arg7[%c1, %c0_10] : memref<216x4xbf16, #tpu.memory_space<vmem>>, vector<144x4xbf16>
    %c2 = arith.constant 2 : index
    %c0_11 = arith.constant 0 : index
    %8 = vector.load %arg7[%c2, %c0_11] : memref<216x4xbf16, #tpu.memory_space<vmem>>, vector<144x4xbf16>
    %c18 = arith.constant 18 : index
    %c0_12 = arith.constant 0 : index
    %9 = vector.load %arg7[%c18, %c0_12] : memref<216x4xbf16, #tpu.memory_space<vmem>>, vector<144x4xbf16>
    %c19 = arith.constant 19 : index
    %c0_13 = arith.constant 0 : index
    %10 = vector.load %arg7[%c19, %c0_13] : memref<216x4xbf16, #tpu.memory_space<vmem>>, vector<144x4xbf16>
    %c20 = arith.constant 20 : index
    %c0_14 = arith.constant 0 : index
    %11 = vector.load %arg7[%c20, %c0_14] : memref<216x4xbf16, #tpu.memory_space<vmem>>, vector<144x4xbf16>
    %c36 = arith.constant 36 : index
    %c0_15 = arith.constant 0 : index
    %12 = vector.load %arg7[%c36, %c0_15] : memref<216x4xbf16, #tpu.memory_space<vmem>>, vector<144x4xbf16>
    %c37 = arith.constant 37 : index
    %c0_16 = arith.constant 0 : index
    %13 = vector.load %arg7[%c37, %c0_16] : memref<216x4xbf16, #tpu.memory_space<vmem>>, vector<144x4xbf16>
    %c38 = arith.constant 38 : index
    %c0_17 = arith.constant 0 : index
    %14 = vector.load %arg7[%c38, %c0_17] : memref<216x4xbf16, #tpu.memory_space<vmem>>, vector<144x4xbf16>
    %15 = tpu.concatenate %6, %7, %8, %9, %10, %11, %12, %13, %14 in 1 : vector<144x4xbf16>, vector<144x4xbf16>, vector<144x4xbf16>, vector<144x4xbf16>, vector<144x4xbf16>, vector<144x4xbf16>, vector<144x4xbf16>, vector<144x4xbf16>, vector<144x4xbf16> -> vector<144x36xbf16>
    %c0_18 = arith.constant 0 : index
    %c0_19 = arith.constant 0 : index
    %16 = vector.load %arg4[%c0_18, %c0_19] : memref<36x128xbf16, #tpu.memory_space<vmem>>, vector<36x128xbf16>
    %cst = arith.constant dense<0.000000e+00> : vector<144x128xf32>
    %17 = tpu.matmul %15, %16, %cst {dimension_numbers = #tpu.dot_dimension_numbers<[1], [0], [0], [1], [0, 0, 1, 1], [], []>} : vector<144x36xbf16>, vector<36x128xbf16>, vector<144x128xf32> -> vector<144x128xf32>
    %c0_20 = arith.constant 0 : index
    %c0_21 = arith.constant 0 : index
    %18 = vector.load %arg5[%c0_20, %c0_21] : memref<1x128xf32, #tpu.memory_space<vmem>>, vector<1x128xf32>
    %19 = vector.broadcast %18 : vector<1x128xf32> to vector<144x128xf32>
    %20 = arith.addf %17, %19 : vector<144x128xf32>
    %c0_22 = arith.constant 0 : index
    %c0_23 = arith.constant 0 : index
    %c0_24 = arith.constant 0 : index
    %21 = vector.load %arg6[%c0_22, %c0_23, %c0_24] : memref<1x144x128xf32, #tpu.memory_space<vmem>>, vector<1x144x128xf32>
    %22 = vector.shape_cast %21 : vector<1x144x128xf32> to vector<144x128xf32>
    %23 = vector.shape_cast %20 : vector<144x128xf32> to vector<1x144x128xf32>
    tpu.vector_store %arg6[%c0_22, %c0_23, %c0_24], %23 {strides = array<i32>} : memref<1x144x128xf32, #tpu.memory_space<vmem>>, vector<1x144x128xf32>,
    return
  }
  func.func @transform_0(%arg0: i32, %arg1: i32) -> (i32, i32, i32) {
    %c0_i32 = arith.constant 0 : i32
    %c0_i32_0 = arith.constant 0 : i32
    return %arg0, %arg1, %c0_i32 : i32, i32, i32
  }
  func.func @transform_1(%arg0: i32, %arg1: i32) -> (i32, i32, i32) {
    %c1_i32 = arith.constant 1 : i32
    %0 = arith.addi %arg1, %c1_i32 : i32
    %c2_i32 = arith.constant 2 : i32
    %1 = arith.muli %0, %c2_i32 : i32
    %c0_i32 = arith.constant 0 : i32
    %c0_i32_0 = arith.constant 0 : i32
    return %arg0, %1, %c0_i32 : i32, i32, i32
  }
  func.func @transform_2(%arg0: i32, %arg1: i32) -> (i32, i32) {
    %c0_i32 = arith.constant 0 : i32
    %c0_i32_0 = arith.constant 0 : i32
    %c0_i32_1 = arith.constant 0 : i32
    return %c0_i32, %c0_i32_0 : i32, i32
  }
  func.func @transform_3(%arg0: i32, %arg1: i32) -> (i32, i32) {
    %c0_i32 = arith.constant 0 : i32
    %c0_i32_0 = arith.constant 0 : i32
    %c0_i32_1 = arith.constant 0 : i32
    return %c0_i32, %c0_i32_0 : i32, i32
  }
  func.func @transform_4(%arg0: i32, %arg1: i32) -> (i32, i32, i32) {
    %c0_i32 = arith.constant 0 : i32
    %c0_i32_0 = arith.constant 0 : i32
    return %arg0, %arg1, %c0_i32 : i32, i32, i32
  }
}

</mosaic_0001>

<llo_original>
// kernel: sparse_conv2d_forward.1
$region0: #{sparse_conv2d_forward.1}
  #allocation0 [shape = 'u32[]', space=smem, size = 0x4, offset = 0x4, fixed_abs, tag = 'smem constant byte address 0x4 - core index']
  #allocation1 [shape = 'u32[72,128]{1,0:T(1,128)}', space=vmem, size = 0x9000, scoped, tag = 'internal scratch']
  #allocation2 [shape = 'bf16[216,4]{1,0:T(8,128)(2,1)}', space=vmem, size = 0xd800, scoped, tag = 'scratch operand']
  %s0 = inlined_call_operand.vmem [shape: bf16[2,432,4], index: 0, kind: input, shape index: {}, may-alias: {0,1}]
  %s1 = inlined_call_operand.vmem [shape: bf16[2,432,4], index: 1, kind: input, shape index: {}, may-alias: {0,1}]
  %s2 = inlined_call_operand.vmem [shape: bf16[36,128], index: 2, kind: input, shape index: {}]
  %s3 = inlined_call_operand.vmem [shape: f32[1,128], index: 3, kind: input, shape index: {}]
  %s4 = inlined_call_operand.vmem [shape: f32[2,288,128], index: 4, kind: output, shape index: {}]
  %s5 = sld [smem:[#allocation0]]
  $region49: #{sparse_conv2d_forward.1} parent=0
    _
  %s7 = ssub.s32 1, %s5
  %s8 = scalar_select 0, %s7, %s5
  loop: start=0, step=1, limit=6
  $region2: #{sparse_conv2d_forward.1} parent=0 // loop_pre_header
    _
  $region3: #{sparse_conv2d_forward.1} parent=0 // loop_header
    %s10 = sphi 0, %s14
    %p11 = scmp.ge.s32.totalorder %s10, 6
    %s17 = sphi 0, %s29
    %s18 = sphi 0, %s25
    %s19 = sphi 0, %s17
    %s20 = sphi 0, %s18
    %s21 = sphi 0, %s19
    %s22 = sphi 0, %s20
    %s34 = sphi 0, %s36
    %s37 = sphi 0, %s34
    %s38 = sphi 0, %s37
    %s54 = sphi 0, %s38
    %s66 = sphi 0, %s68
    %s69 = sphi 0, %s66
    %s70 = sphi 0, %s69
    %s86 = sphi 0, %s70
    %s90 = sphi 0, %s90
    %s92 = sphi 0, %s90
    %s93 = sphi 0, %s92
    %s107 = sphi 0, %s93
    %s111 = sphi 0, %s111
    %s113 = sphi 0, %s111
    %s114 = sphi 0, %s113
    %s128 = sphi 0, %s114
    %s136 = sphi 0, %s138
    %s139 = sphi 0, %s136
    %s140 = sphi 0, %s139
    %s156 = sphi 0, %s140
  $region4: #{sparse_conv2d_forward.1} parent=0 // loop_header_branch
    %13 = sbr.rel (%p11) target = $region8
  $region5: #{sparse_conv2d_forward.1} parent=0 // loop_body
    %s15 = ssub.s32 %s10, 1
    %s16 = ssub.s32 %s10, 2
    %s23 = sadd.s32 1, %s18
    %p24 = scmp.ge.s32.totalorder %s23, 2
    %s25 = scalar_select %p24, 0, %s23
    %s26 = sadd.s32 1, %s17
    %s27 = scalar_select %p24, %s26, %s17
    %p28 = scmp.ge.s32.totalorder %s27, 2
    %s29 = scalar_select %p28, 0, %s27
    %s30 = ssub.s32 %s17, %s29
    %s31 = ssub.s32 %s18, %s25
    %s32 = sor.u32 %s30, %s31
    %p33 = scmp.eq.s32.totalorder %s32, 0
    %s35 = sadd.s32 %s34, 1
    %s36 = scalar_select %p33, %s34, %s35
    %p39 = pneg %p33
    %p40 = scmp.eq.s32.totalorder %s10, 3
    %p41 = por %p39, %p40
    %p42 = scmp.ne.s32.totalorder %s34, %s37
    %p43 = scmp.eq.s32.totalorder %s10, 0
    %p44 = por %p42, %p43
    %p45 = scmp.ne.s32.totalorder %s34, %s37
    %p46 = scmp.eq.s32.totalorder %s15, 3
    %p47 = por %p45, %p46
    %p48 = scmp.ne.s32.totalorder %s37, %s38
    %p49 = scmp.eq.s32.totalorder %s15, 0
    %p50 = por %p48, %p49
    %p51 = scmp.ne.s32.totalorder %s37, %s38
    %p52 = scmp.eq.s32.totalorder %s16, 3
    %p53 = por %p51, %p52
    %p55 = scmp.ne.s32.totalorder %s38, %s54
    %p56 = scmp.eq.s32.totalorder %s16, 0
    %p57 = por %p55, %p56
    %s58 = sadd.s32 %s18, 1
    %s59 = smul.u32 %s58, 2
    %s60 = sadd.s32 %s25, 1
    %s61 = smul.u32 %s60, 2
    %s62 = ssub.s32 %s17, %s29
    %s63 = ssub.s32 %s59, %s61
    %s64 = sor.u32 %s62, %s63
    %p65 = scmp.eq.s32.totalorder %s64, 0
    %s67 = sadd.s32 %s66, 1
    %s68 = scalar_select %p65, %s66, %s67
    %p71 = pneg %p65
    %p72 = scmp.eq.s32.totalorder %s10, 3
    %p73 = por %p71, %p72
    %p74 = scmp.ne.s32.totalorder %s66, %s69
    %p75 = scmp.eq.s32.totalorder %s10, 0
    %p76 = por %p74, %p75
    %p77 = scmp.ne.s32.totalorder %s66, %s69
    %p78 = scmp.eq.s32.totalorder %s15, 3
    %p79 = por %p77, %p78
    %p80 = scmp.ne.s32.totalorder %s69, %s70
    %p81 = scmp.eq.s32.totalorder %s15, 0
    %p82 = por %p80, %p81
    %p83 = scmp.ne.s32.totalorder %s69, %s70
    %p84 = scmp.eq.s32.totalorder %s16, 3
    %p85 = por %p83, %p84
    %p87 = scmp.ne.s32.totalorder %s70, %s86
    %p88 = scmp.eq.s32.totalorder %s16, 0
    %p89 = por %p87, %p88
    %s91 = sadd.s32 %s90, 1
    %p94 = scmp.eq.s32.totalorder %s10, 3
    %p95 = scmp.ne.s32.totalorder %s90, %s92
    %p96 = scmp.eq.s32.totalorder %s10, 0
    %p97 = por %p95, %p96
    %p98 = scmp.ne.s32.totalorder %s90, %s92
    %p99 = scmp.eq.s32.totalorder %s15, 3
    %p100 = por %p98, %p99
    %p101 = scmp.ne.s32.totalorder %s92, %s93
    %p102 = scmp.eq.s32.totalorder %s15, 0
    %p103 = por %p101, %p102
    %p104 = scmp.ne.s32.totalorder %s92, %s93
    %p105 = scmp.eq.s32.totalorder %s16, 3
    %p106 = por %p104, %p105
    %p108 = scmp.ne.s32.totalorder %s93, %s107
    %p109 = scmp.eq.s32.totalorder %s16, 0
    %p110 = por %p108, %p109
    %s112 = sadd.s32 %s111, 1
    %p115 = scmp.eq.s32.totalorder %s10, 3
    %p116 = scmp.ne.s32.totalorder %s111, %s113
    %p117 = scmp.eq.s32.totalorder %s10, 0
    %p118 = por %p116, %p117
    %p119 = scmp.ne.s32.totalorder %s111, %s113
    %p120 = scmp.eq.s32.totalorder %s15, 3
    %p121 = por %p119, %p120
    %p122 = scmp.ne.s32.totalorder %s113, %s114
    %p123 = scmp.eq.s32.totalorder %s15, 0
    %p124 = por %p122, %p123
    %p125 = scmp.ne.s32.totalorder %s113, %s114
    %p126 = scmp.eq.s32.totalorder %s16, 3
    %p127 = por %p125, %p126
    %p129 = scmp.ne.s32.totalorder %s114, %s128
    %p130 = scmp.eq.s32.totalorder %s16, 0
    %p131 = por %p129, %p130
    %s132 = ssub.s32 %s17, %s29
    %s133 = ssub.s32 %s18, %s25
    %s134 = sor.u32 %s132, %s133
    %p135 = scmp.eq.s32.totalorder %s134, 0
    %s137 = sadd.s32 %s136, 1
    %s138 = scalar_select %p135, %s136, %s137
    %p141 = pneg %p135
    %p142 = scmp.eq.s32.totalorder %s10, 3
    %p143 = por %p141, %p142
    %p144 = scmp.ne.s32.totalorder %s136, %s139
    %p145 = scmp.eq.s32.totalorder %s10, 0
    %p146 = por %p144, %p145
    %p147 = scmp.ne.s32.totalorder %s136, %s139
    %p148 = scmp.eq.s32.totalorder %s15, 3
    %p149 = por %p147, %p148
    %p150 = scmp.ne.s32.totalorder %s139, %s140
    %p151 = scmp.eq.s32.totalorder %s15, 0
    %p152 = por %p150, %p151
    %p153 = scmp.ne.s32.totalorder %s139, %s140
    %p154 = scmp.eq.s32.totalorder %s16, 3
    %p155 = por %p153, %p154
    %p157 = scmp.ne.s32.totalorder %s140, %s156
    %p158 = scmp.eq.s32.totalorder %s16, 0
    %p159 = por %p157, %p158
    %p160 = scmp.le.s32.totalorder 1, %s10
    %p161 = scmp.lt.s32.totalorder %s10, 5
    %p162 = pnand %p160, %p161
    %p163 = pneg %p162
    // Predicated region
    $region9: #{sparse_conv2d_forward.1} parent=5 // pred_check
      _
    $region10: #{sparse_conv2d_forward.1} parent=5 // pred_check_branch
      %165 = sbr.rel (%p162) target = $region12
    $region11: #{sparse_conv2d_forward.1} parent=5 // pred_region
      %s166 = ssub.s32 %s10, 1
      // Predicated region
      $region13: #{sparse_conv2d_forward.1} parent=11 // pred_check
        %p167 = pneg %p103
      $region14: #{sparse_conv2d_forward.1} parent=11 // pred_check_branch
        %169 = sbr.rel (%p167) target = $region16
      $region15: #{sparse_conv2d_forward.1} parent=11 // pred_region
        _
      $region16: #{sparse_conv2d_forward.1} parent=11 // pred_fallthru
        _
      // Predicated region
      $region17: #{sparse_conv2d_forward.1} parent=11 // pred_check
        %p170 = pneg %p124
      $region18: #{sparse_conv2d_forward.1} parent=11 // pred_check_branch
        %172 = sbr.rel (%p170) target = $region20
      $region19: #{sparse_conv2d_forward.1} parent=11 // pred_region
        _
      $region20: #{sparse_conv2d_forward.1} parent=11 // pred_fallthru
        _
    $region12: #{sparse_conv2d_forward.1} parent=5 // pred_fallthru
      _
    %p173 = scmp.lt.s32.totalorder %s10, 4
    // Predicated region
    $region21: #{sparse_conv2d_forward.1} parent=5 // pred_check
      %p174 = pneg %p173
    $region22: #{sparse_conv2d_forward.1} parent=5 // pred_check_branch
      %176 = sbr.rel (%p174) target = $region24
    $region23: #{sparse_conv2d_forward.1} parent=5 // pred_region
      // Predicated region
      $region25: #{sparse_conv2d_forward.1} parent=23 // pred_check
        %p177 = pneg %p44
      $region26: #{sparse_conv2d_forward.1} parent=23 // pred_check_branch
        %179 = sbr.rel (%p177) target = $region28
      $region27: #{sparse_conv2d_forward.1} parent=23 // pred_region
        %s180 = smul.u32 18, %s18
        %p181 = scmp.lt.s32.totalorder %s17, 1
        %s182 = scalar_select %p181, %s17, 1
        %p183 = scmp.lt.s32.totalorder %s180, 53
        %s184 = scalar_select %p183, %s180, 53
        %s185 = smul.addr %s182, 54
        %s186 = sadd.s32 %s184, %s185
        %s187 = smul.addr %s186, 4
        %s188 = scalar_lea.vmem %s0, %s187
        %s189 = smul.u32 18, %s18
      $region28: #{sparse_conv2d_forward.1} parent=23 // pred_fallthru
        _
      // Predicated region
      $region29: #{sparse_conv2d_forward.1} parent=23 // pred_check
        %p190 = pneg %p76
      $region30: #{sparse_conv2d_forward.1} parent=23 // pred_check_branch
        %192 = sbr.rel (%p190) target = $region32
      $region31: #{sparse_conv2d_forward.1} parent=23 // pred_region
        %s193 = sadd.s32 %s18, 1
        %s194 = smul.u32 %s193, 2
        %s195 = smul.u32 9, %s194
        %p196 = scmp.lt.s32.totalorder %s17, 1
        %s197 = scalar_select %p196, %s17, 1
        %p198 = scmp.lt.s32.totalorder %s195, 53
        %s199 = scalar_select %p198, %s195, 53
        %s200 = smul.addr %s197, 54
        %s201 = sadd.s32 %s199, %s200
        %s202 = smul.addr %s201, 4
        %s203 = scalar_lea.vmem %s1, %s202
        %s204 = sadd.s32 %s18, 1
        %s205 = smul.u32 %s204, 2
        %s206 = smul.u32 9, %s205
      $region32: #{sparse_conv2d_forward.1} parent=23 // pred_fallthru
        _
    $region24: #{sparse_conv2d_forward.1} parent=5 // pred_fallthru
      _
    %p207 = scmp.le.s32.totalorder 1, %s10
    %p208 = scmp.lt.s32.totalorder %s10, 5
    %p209 = pnand %p207, %p208
    %p210 = pneg %p209
    // Predicated region
    $region33: #{sparse_conv2d_forward.1} parent=5 // pred_check
      _
    $region34: #{sparse_conv2d_forward.1} parent=5 // pred_check_branch
      %212 = sbr.rel (%p209) target = $region36
    $region35: #{sparse_conv2d_forward.1} parent=5 // pred_region
      %s213 = ssub.s32 %s10, 1
      %s214 = smul.u32 18, %s20
      %p215 = scmp.lt.s32.totalorder %s19, 1
      %s216 = scalar_select %p215, %s19, 1
      %p217 = scmp.lt.s32.totalorder %s214, 53
      %s218 = scalar_select %p217, %s214, 53
      %s219 = smul.addr %s216, 54
      %s220 = sadd.s32 %s218, %s219
      %s221 = smul.addr %s220, 4
      %s222 = scalar_lea.vmem %s0, %s221
      %p223 = pneg %p50
      %p224 = pneg %p47
      %s225 = sadd.s32 %s20, 1
      %s226 = smul.u32 %s225, 2
      %s227 = smul.u32 9, %s226
      %p228 = scmp.lt.s32.totalorder %s19, 1
      %s229 = scalar_select %p228, %s19, 1
      %p230 = scmp.lt.s32.totalorder %s227, 53
      %s231 = scalar_select %p230, %s227, 53
      %s232 = smul.addr %s229, 54
      %s233 = sadd.s32 %s231, %s232
      %s234 = smul.addr %s233, 4
      %s235 = scalar_lea.vmem %s1, %s234
      %p236 = pneg %p82
      %p237 = pneg %p79
      %p238 = pneg %p103
      %p239 = pneg %p100
      %p240 = pneg %p124
      %p241 = pneg %p121
      %p242 = pneg %p152
      %p243 = pneg %p149
      %s244 = smul.u32 18, %s20
      %p245 = scmp.lt.s32.totalorder %s19, 1
      %s246 = scalar_select %p245, %s19, 1
      %p247 = scmp.lt.s32.totalorder %s244, 35
      %s248 = scalar_select %p247, %s244, 35
      %s249 = smul.addr %s246, 36
      %s250 = sadd.s32 %s248, %s249
      %s251 = smul.addr %s250, 8
      %s252 = scalar_lea.vmem %s4, %s251
      %s253 = smul.u32 18, %s20
      %p254 = scmp.lt.s32.totalorder %s19, 1
      %s255 = scalar_select %p254, %s19, 1
      %p256 = scmp.lt.s32.totalorder %s253, 53
      %s257 = scalar_select %p256, %s253, 53
      %s258 = smul.addr %s255, 54
      %s259 = sadd.s32 %s257, %s258
      %s260 = smul.addr %s259, 4
      %s261 = scalar_lea.vmem %s0, %s260
      %s262 = smul.u32 18, %s20
      %s263 = sadd.s32 %s20, 1
      %s264 = smul.u32 %s263, 2
      %s265 = smul.u32 9, %s264
      %p266 = scmp.lt.s32.totalorder %s19, 1
      %s267 = scalar_select %p266, %s19, 1
      %p268 = scmp.lt.s32.totalorder %s265, 53
      %s269 = scalar_select %p268, %s265, 53
      %s270 = smul.addr %s267, 54
      %s271 = sadd.s32 %s269, %s270
      %s272 = smul.addr %s271, 4
      %s273 = scalar_lea.vmem %s1, %s272
      %s274 = sadd.s32 %s20, 1
      %s275 = smul.u32 %s274, 2
      %s276 = smul.u32 9, %s275
      %s277 = smul.u32 18, %s20
      %p278 = scmp.lt.s32.totalorder %s19, 1
      %s279 = scalar_select %p278, %s19, 1
      %p280 = scmp.lt.s32.totalorder %s277, 35
      %s281 = scalar_select %p280, %s277, 35
      %s282 = smul.addr %s279, 36
      %s283 = sadd.s32 %s281, %s282
      %s284 = smul.addr %s283, 8
      %s285 = scalar_lea.vmem %s4, %s284
      %s286 = smul.u32 18, %s20
      %v288 = vld [vmem:[%s261] sm:$0xf]
      %v289 = vld [vmem:[%s261 + $0x4] sm:$0xf]
      %v290 = vld [vmem:[%s261 + $0x8] sm:$0xf]
      %v291 = vld [vmem:[%s261 + $0xc] sm:$0xf]
      %v292 = vld [vmem:[%s261 + $0x10] sm:$0xf]
      %v293 = vld [vmem:[%s261 + $0x14] sm:$0xf]
      %v294 = vld [vmem:[%s261 + $0x18] sm:$0xf]
      %v295 = vld [vmem:[%s261 + $0x1c] sm:$0xf]
      %v296 = vld [vmem:[%s261 + $0x20] sm:$0xf]
      %v297 = vld [vmem:[%s261 + $0x24] sm:$0xf]
      %v298 = vld [vmem:[%s261 + $0x28] sm:$0xf]
      %v299 = vld [vmem:[%s261 + $0x2c] sm:$0xf]
      %v300 = vld [vmem:[%s261 + $0x30] sm:$0xf]
      %v301 = vld [vmem:[%s261 + $0x34] sm:$0xf]
      %v302 = vld [vmem:[%s261 + $0x38] sm:$0xf]
      %v303 = vld [vmem:[%s261 + $0x3c] sm:$0xf]
      %v304 = vld [vmem:[%s261 + $0x40] sm:$0xf]
      %v305 = vld [vmem:[%s261 + $0x44] sm:$0xf]
      %vm306 = vcmask 27648
      %307 = vst.msk [vmem:[#allocation2] sm:$0xf] %vm306, %v288
      %308 = vst.msk [vmem:[#allocation2 + $0x4] sm:$0xf] %vm306, %v289
      %309 = vst.msk [vmem:[#allocation2 + $0x8] sm:$0xf] %vm306, %v290
      %310 = vst.msk [vmem:[#allocation2 + $0xc] sm:$0xf] %vm306, %v291
      %311 = vst.msk [vmem:[#allocation2 + $0x10] sm:$0xf] %vm306, %v292
      %312 = vst.msk [vmem:[#allocation2 + $0x14] sm:$0xf] %vm306, %v293
      %313 = vst.msk [vmem:[#allocation2 + $0x18] sm:$0xf] %vm306, %v294
      %314 = vst.msk [vmem:[#allocation2 + $0x1c] sm:$0xf] %vm306, %v295
      %315 = vst.msk [vmem:[#allocation2 + $0x20] sm:$0xf] %vm306, %v296
      %316 = vst.msk [vmem:[#allocation2 + $0x24] sm:$0xf] %vm306, %v297
      %317 = vst.msk [vmem:[#allocation2 + $0x28] sm:$0xf] %vm306, %v298
      %318 = vst.msk [vmem:[#allocation2 + $0x2c] sm:$0xf] %vm306, %v299
      %319 = vst.msk [vmem:[#allocation2 + $0x30] sm:$0xf] %vm306, %v300
      %320 = vst.msk [vmem:[#allocation2 + $0x34] sm:$0xf] %vm306, %v301
      %321 = vst.msk [vmem:[#allocation2 + $0x38] sm:$0xf] %vm306, %v302
      %322 = vst.msk [vmem:[#allocation2 + $0x3c] sm:$0xf] %vm306, %v303
      %323 = vst.msk [vmem:[#allocation2 + $0x40] sm:$0xf] %vm306, %v304
      %324 = vst.msk [vmem:[#allocation2 + $0x44] sm:$0xf] %vm306, %v305
      %v325 = vld [vmem:[%s273] sm:$0xf]
      %v326 = vld [vmem:[%s273 + $0x4] sm:$0xf]
      %v327 = vld [vmem:[%s273 + $0x8] sm:$0xf]
      %v328 = vld [vmem:[%s273 + $0xc] sm:$0xf]
      %v329 = vld [vmem:[%s273 + $0x10] sm:$0xf]
      %v330 = vld [vmem:[%s273 + $0x14] sm:$0xf]
      %v331 = vld [vmem:[%s273 + $0x18] sm:$0xf]
      %v332 = vld [vmem:[%s273 + $0x1c] sm:$0xf]
      %v333 = vld [vmem:[%s273 + $0x20] sm:$0xf]
      %334 = vst.msk [vmem:[#allocation2 + $0x48] sm:$0xf] %vm306, %v325
      %335 = vst.msk [vmem:[#allocation2 + $0x4c] sm:$0xf] %vm306, %v326
      %336 = vst.msk [vmem:[#allocation2 + $0x50] sm:$0xf] %vm306, %v327
      %337 = vst.msk [vmem:[#allocation2 + $0x54] sm:$0xf] %vm306, %v328
      %338 = vst.msk [vmem:[#allocation2 + $0x58] sm:$0xf] %vm306, %v329
      %339 = vst.msk [vmem:[#allocation2 + $0x5c] sm:$0xf] %vm306, %v330
      %340 = vst.msk [vmem:[#allocation2 + $0x60] sm:$0xf] %vm306, %v331
      %341 = vst.msk [vmem:[#allocation2 + $0x64] sm:$0xf] %vm306, %v332
      %342 = vst.msk [vmem:[#allocation2 + $0x68] sm:$0xf] %vm306, %v333
      %v343 = vld [vmem:[#allocation2] sm:$0xf]
      %v344 = vld [vmem:[#allocation2 + $0x4] sm:$0xf]
      %v345 = vld [vmem:[#allocation2 + $0x8] sm:$0xf]
      %v346 = vld [vmem:[#allocation2 + $0xc] sm:$0xf]
      %v347 = vld [vmem:[#allocation2 + $0x10] sm:$0xf]
      %v348 = vld [vmem:[#allocation2 + $0x14] sm:$0xf]
      %v349 = vld [vmem:[#allocation2 + $0x18] sm:$0xf]
      %v350 = vld [vmem:[#allocation2 + $0x1c] sm:$0xf]
      %v351 = vld [vmem:[#allocation2 + $0x20] sm:$0xf]
      %v352 = vld [vmem:[#allocation2 + $0x24] sm:$0xf]
      %v353 = vld [vmem:[#allocation2 + $0x28] sm:$0xf]
      %v354 = vld [vmem:[#allocation2 + $0x2c] sm:$0xf]
      %v355 = vld [vmem:[#allocation2 + $0x30] sm:$0xf]
      %v356 = vld [vmem:[#allocation2 + $0x34] sm:$0xf]
      %v357 = vld [vmem:[#allocation2 + $0x38] sm:$0xf]
      %v358 = vld [vmem:[#allocation2 + $0x3c] sm:$0xf]
      %v359 = vld [vmem:[#allocation2 + $0x40] sm:$0xf]
      %v360 = vld [vmem:[#allocation2 + $0x44] sm:$0xf]
      %v361 = vld [vmem:[#allocation2 + $0x48] sm:$0x1]
      %v362 = vld [vmem:[#allocation2] sm:$0xe]
      %v363 = vld [vmem:[#allocation2 + $0x8] sm:$0xe]
      %v364 = vld [vmem:[#allocation2 + $0x48] sm:$0xf]
      %v365 = vld [vmem:[#allocation2 + $0x4c] sm:$0xf]
      %v366 = vld [vmem:[#allocation2 + $0x50] sm:$0x1]
      %v367 = vld [vmem:[#allocation2 + $0x50] sm:$0x3]
      %v368 = vld [vmem:[#allocation2 + $0x8] sm:$0xc]
      %v369 = vld [vmem:[#allocation2 + $0x10] sm:$0xc]
      %v370 = vld [vmem:[#allocation2 + $0x50] sm:$0xf]
      %v371 = vld [vmem:[#allocation2 + $0x54] sm:$0xf]
      %v372 = vld [vmem:[#allocation2 + $0x58] sm:$0x3]
      %v373 = vld [vmem:[#allocation2 + $0x58] sm:$0x7]
      %v374 = vld [vmem:[#allocation2 + $0x10] sm:$0x8]
      %v393 = vunpack.c.l.b16 %v343
      %v394 = vunpack.c.l.b16 %v344
      %v395 = vunpack.c.l.b16 %v345
      %v396 = vunpack.c.l.b16 %v346
      %v397 = vunpack.c.l.b16 %v347
      %v398 = vunpack.c.l.b16 %v348
      %v399 = vunpack.c.l.b16 %v349
      %v400 = vunpack.c.l.b16 %v350
      %v401 = vunpack.c.l.b16 %v351
      %v402 = vunpack.c.l.b16 %v352
      %v403 = vunpack.c.l.b16 %v353
      %v404 = vunpack.c.l.b16 %v354
      %v405 = vunpack.c.l.b16 %v355
      %v406 = vunpack.c.l.b16 %v356
      %v407 = vunpack.c.l.b16 %v357
      %v408 = vunpack.c.l.b16 %v358
      %v409 = vunpack.c.l.b16 %v359
      %v410 = vunpack.c.l.b16 %v360
      %v411 = vpack.c.b16 %v394, %v393
      %v412 = vpack.c.b16 %v396, %v395
      %v413 = vpack.c.b16 %v398, %v397
      %v414 = vpack.c.b16 %v400, %v399
      %v415 = vpack.c.b16 %v402, %v401
      %v416 = vpack.c.b16 %v404, %v403
      %v417 = vpack.c.b16 %v406, %v405
      %v418 = vpack.c.b16 %v408, %v407
      %v419 = vpack.c.b16 %v410, %v409
      %v421 = vunpack.c.l.b16 %v361
      %v422 = vpack.c.b16 %v421, %v421
      %vm423 = vsmask.f32 7424
      %v425 = vshrl.u32 %v411, 16
      %v427 = vshll.u32 %v411, 16
      %v429 = vrot.slane %v427, 1
      %v430 = vor.u32 %v425, %v429
      %v432 = vshll.u32 %v412, 16
      %v434 = vrot.slane %v432, 1
      %v435 = vsel %vm423, %v430, %v434
      %v436 = vshrl.u32 %v412, 16
      %v438 = vor.u32 %v436, %v434
      %v440 = vshll.u32 %v413, 16
      %v442 = vrot.slane %v440, 1
      %v443 = vsel %vm423, %v438, %v442
      %v444 = vshrl.u32 %v413, 16
      %v446 = vor.u32 %v444, %v442
      %v448 = vshll.u32 %v414, 16
      %v450 = vrot.slane %v448, 1
      %v451 = vsel %vm423, %v446, %v450
      %v452 = vshrl.u32 %v414, 16
      %v454 = vor.u32 %v452, %v450
      %v456 = vshll.u32 %v415, 16
      %v458 = vrot.slane %v456, 1
      %v459 = vsel %vm423, %v454, %v458
      %v460 = vshrl.u32 %v415, 16
      %v462 = vor.u32 %v460, %v458
      %v464 = vshll.u32 %v416, 16
      %v466 = vrot.slane %v464, 1
      %v467 = vsel %vm423, %v462, %v466
      %v468 = vshrl.u32 %v416, 16
      %v470 = vor.u32 %v468, %v466
      %v472 = vshll.u32 %v417, 16
      %v474 = vrot.slane %v472, 1
      %v475 = vsel %vm423, %v470, %v474
      %v476 = vshrl.u32 %v417, 16
      %v478 = vor.u32 %v476, %v474
      %v480 = vshll.u32 %v418, 16
      %v482 = vrot.slane %v480, 1
      %v483 = vsel %vm423, %v478, %v482
      %v484 = vshrl.u32 %v418, 16
      %v486 = vor.u32 %v484, %v482
      %v488 = vshll.u32 %v419, 16
      %v490 = vrot.slane %v488, 1
      %v491 = vsel %vm423, %v486, %v490
      %v492 = vshrl.u32 %v419, 16
      %v494 = vor.u32 %v492, %v490
      %v496 = vshll.u32 %v422, 16
      %v498 = vrot.slane %v496, 1
      %v499 = vsel %vm423, %v494, %v498
      %500 = vrot.lane.b32.xlu0 %v435, 4
      %v501 = vpop.permute.xlu0 %500
      %502 = vrot.lane.b32.xlu0 %v443, 4
      %v503 = vpop.permute.xlu0 %502
      %504 = vrot.lane.b32.xlu0 %v451, 4
      %v505 = vpop.permute.xlu0 %504
      %506 = vrot.lane.b32.xlu0 %v459, 4
      %v507 = vpop.permute.xlu0 %506
      %508 = vrot.lane.b32.xlu0 %v467, 4
      %v509 = vpop.permute.xlu0 %508
      %510 = vrot.lane.b32.xlu0 %v475, 4
      %v511 = vpop.permute.xlu0 %510
      %512 = vrot.lane.b32.xlu0 %v483, 4
      %v513 = vpop.permute.xlu0 %512
      %514 = vrot.lane.b32.xlu0 %v491, 4
      %v515 = vpop.permute.xlu0 %514
      %516 = vrot.lane.b32.xlu0 %v499, 4
      %v517 = vpop.permute.xlu0 %516
      %v519 = vunpack.c.l.b16 %v362
      %v520 = vpack.c.b16 %v394, %v519
      %vm521 = vcmask 1046528
      %v522 = vrot.slane %v520, 1
      %v523 = vrot.slane %v412, 1
      %v524 = vsel %vm521, %v522, %v523
      %v525 = vrot.slane %v413, 1
      %v526 = vsel %vm521, %v523, %v525
      %v527 = vrot.slane %v414, 1
      %v528 = vsel %vm521, %v525, %v527
      %v529 = vrot.slane %v415, 1
      %v530 = vsel %vm521, %v527, %v529
      %v531 = vrot.slane %v416, 1
      %v532 = vsel %vm521, %v529, %v531
      %v533 = vrot.slane %v417, 1
      %v534 = vsel %vm521, %v531, %v533
      %v535 = vrot.slane %v418, 1
      %v536 = vsel %vm521, %v533, %v535
      %v537 = vrot.slane %v419, 1
      %v538 = vsel %vm521, %v535, %v537
      %v539 = vrot.slane %v422, 1
      %v540 = vsel %vm521, %v537, %v539
      %541 = vrot.lane.b32.xlu0 %v524, 8
      %v542 = vpop.permute.xlu0 %541
      %543 = vrot.lane.b32.xlu0 %v526, 8
      %v544 = vpop.permute.xlu0 %543
      %545 = vrot.lane.b32.xlu0 %v528, 8
      %v546 = vpop.permute.xlu0 %545
      %547 = vrot.lane.b32.xlu0 %v530, 8
      %v548 = vpop.permute.xlu0 %547
      %549 = vrot.lane.b32.xlu0 %v532, 8
      %v550 = vpop.permute.xlu0 %549
      %551 = vrot.lane.b32.xlu0 %v534, 8
      %v552 = vpop.permute.xlu0 %551
      %553 = vrot.lane.b32.xlu0 %v536, 8
      %v554 = vpop.permute.xlu0 %553
      %555 = vrot.lane.b32.xlu0 %v538, 8
      %v556 = vpop.permute.xlu0 %555
      %557 = vrot.lane.b32.xlu0 %v540, 8
      %v558 = vpop.permute.xlu0 %557
      %v563 = vunpack.c.l.b16 %v363
      %v564 = vunpack.c.l.b16 %v364
      %v565 = vunpack.c.l.b16 %v365
      %v566 = vunpack.c.l.b16 %v366
      %v567 = vpack.c.b16 %v396, %v563
      %v568 = vpack.c.b16 %v565, %v564
      %v569 = vpack.c.b16 %v566, %v566
      %v570 = vrot.slane %v567, 1
      %v571 = vsel %vm521, %v570, %v525
      %v572 = vrot.slane %v568, 1
      %v573 = vsel %vm521, %v537, %v572
      %v574 = vrot.slane %v569, 1
      %v575 = vsel %vm521, %v572, %v574
      %576 = vrot.lane.b32.xlu0 %v571, 12
      %v577 = vpop.permute.xlu0 %576
      %578 = vrot.lane.b32.xlu0 %v528, 12
      %v579 = vpop.permute.xlu0 %578
      %580 = vrot.lane.b32.xlu0 %v530, 12
      %v581 = vpop.permute.xlu0 %580
      %582 = vrot.lane.b32.xlu0 %v532, 12
      %v583 = vpop.permute.xlu0 %582
      %584 = vrot.lane.b32.xlu0 %v534, 12
      %v585 = vpop.permute.xlu0 %584
      %586 = vrot.lane.b32.xlu0 %v536, 12
      %v587 = vpop.permute.xlu0 %586
      %588 = vrot.lane.b32.xlu0 %v538, 12
      %v589 = vpop.permute.xlu0 %588
      %590 = vrot.lane.b32.xlu0 %v573, 12
      %v591 = vpop.permute.xlu0 %590
      %592 = vrot.lane.b32.xlu0 %v575, 12
      %v593 = vpop.permute.xlu0 %592
      %v595 = vunpack.c.l.b16 %v367
      %v596 = vpack.c.b16 %v595, %v595
      %vm597 = vsmask.f32 6400
      %v599 = vshrl.u32 %v567, 16
      %v601 = vrot.slane %v599, 1
      %v602 = vshll.u32 %v567, 16
      %v604 = vrot.slane %v602, 2
      %v605 = vor.u32 %v601, %v604
      %v606 = vrot.slane %v444, 1
      %v607 = vrot.slane %v440, 2
      %v608 = vor.u32 %v606, %v607
      %v609 = vsel %vm597, %v605, %v608
      %v610 = vrot.slane %v452, 1
      %v611 = vrot.slane %v448, 2
      %v612 = vor.u32 %v610, %v611
      %v613 = vsel %vm597, %v608, %v612
      %v614 = vrot.slane %v460, 1
      %v615 = vrot.slane %v456, 2
      %v616 = vor.u32 %v614, %v615
      %v617 = vsel %vm597, %v612, %v616
      %v618 = vrot.slane %v468, 1
      %v619 = vrot.slane %v464, 2
      %v620 = vor.u32 %v618, %v619
      %v621 = vsel %vm597, %v616, %v620
      %v622 = vrot.slane %v476, 1
      %v623 = vrot.slane %v472, 2
      %v624 = vor.u32 %v622, %v623
      %v625 = vsel %vm597, %v620, %v624
      %v626 = vrot.slane %v484, 1
      %v627 = vrot.slane %v480, 2
      %v628 = vor.u32 %v626, %v627
      %v629 = vsel %vm597, %v624, %v628
      %v630 = vrot.slane %v492, 1
      %v631 = vrot.slane %v488, 2
      %v632 = vor.u32 %v630, %v631
      %v633 = vsel %vm597, %v628, %v632
      %v635 = vshrl.u32 %v568, 16
      %v637 = vrot.slane %v635, 1
      %v638 = vshll.u32 %v568, 16
      %v640 = vrot.slane %v638, 2
      %v641 = vor.u32 %v637, %v640
      %v642 = vsel %vm597, %v632, %v641
      %v644 = vshrl.u32 %v596, 16
      %v646 = vrot.slane %v644, 1
      %v647 = vshll.u32 %v596, 16
      %v649 = vrot.slane %v647, 2
      %v650 = vor.u32 %v646, %v649
      %v651 = vsel %vm597, %v641, %v650
      %652 = vrot.lane.b32.xlu0 %v609, 16
      %v653 = vpop.permute.xlu0 %652
      %654 = vrot.lane.b32.xlu0 %v613, 16
      %v655 = vpop.permute.xlu0 %654
      %656 = vrot.lane.b32.xlu0 %v617, 16
      %v657 = vpop.permute.xlu0 %656
      %658 = vrot.lane.b32.xlu0 %v621, 16
      %v659 = vpop.permute.xlu0 %658
      %660 = vrot.lane.b32.xlu0 %v625, 16
      %v661 = vpop.permute.xlu0 %660
      %662 = vrot.lane.b32.xlu0 %v629, 16
      %v663 = vpop.permute.xlu0 %662
      %664 = vrot.lane.b32.xlu0 %v633, 16
      %v665 = vpop.permute.xlu0 %664
      %666 = vrot.lane.b32.xlu0 %v642, 16
      %v667 = vpop.permute.xlu0 %666
      %668 = vrot.lane.b32.xlu0 %v651, 16
      %v669 = vpop.permute.xlu0 %668
      %v671 = vunpack.c.l.b16 %v368
      %v672 = vpack.c.b16 %v396, %v671
      %vm673 = vcmask 1045504
      %v674 = vrot.slane %v672, 2
      %v675 = vrot.slane %v413, 2
      %v676 = vsel %vm673, %v674, %v675
      %v677 = vrot.slane %v414, 2
      %v678 = vsel %vm673, %v675, %v677
      %v679 = vrot.slane %v415, 2
      %v680 = vsel %vm673, %v677, %v679
      %v681 = vrot.slane %v416, 2
      %v682 = vsel %vm673, %v679, %v681
      %v683 = vrot.slane %v417, 2
      %v684 = vsel %vm673, %v681, %v683
      %v685 = vrot.slane %v418, 2
      %v686 = vsel %vm673, %v683, %v685
      %v687 = vrot.slane %v419, 2
      %v688 = vsel %vm673, %v685, %v687
      %v689 = vrot.slane %v568, 2
      %v690 = vsel %vm673, %v687, %v689
      %v691 = vrot.slane %v596, 2
      %v692 = vsel %vm673, %v689, %v691
      %693 = vrot.lane.b32.xlu0 %v676, 20
      %v694 = vpop.permute.xlu0 %693
      %695 = vrot.lane.b32.xlu0 %v678, 20
      %v696 = vpop.permute.xlu0 %695
      %697 = vrot.lane.b32.xlu0 %v680, 20
      %v698 = vpop.permute.xlu0 %697
      %699 = vrot.lane.b32.xlu0 %v682, 20
      %v700 = vpop.permute.xlu0 %699
      %701 = vrot.lane.b32.xlu0 %v684, 20
      %v702 = vpop.permute.xlu0 %701
      %703 = vrot.lane.b32.xlu0 %v686, 20
      %v704 = vpop.permute.xlu0 %703
      %705 = vrot.lane.b32.xlu0 %v688, 20
      %v706 = vpop.permute.xlu0 %705
      %707 = vrot.lane.b32.xlu0 %v690, 20
      %v708 = vpop.permute.xlu0 %707
      %709 = vrot.lane.b32.xlu0 %v692, 20
      %v710 = vpop.permute.xlu0 %709
      %v715 = vunpack.c.l.b16 %v369
      %v716 = vunpack.c.l.b16 %v370
      %v717 = vunpack.c.l.b16 %v371
      %v718 = vunpack.c.l.b16 %v372
      %v719 = vpack.c.b16 %v398, %v715
      %v720 = vpack.c.b16 %v717, %v716
      %v721 = vpack.c.b16 %v718, %v718
      %v722 = vrot.slane %v719, 2
      %v723 = vsel %vm673, %v722, %v677
      %v724 = vrot.slane %v720, 2
      %v725 = vsel %vm673, %v689, %v724
      %v726 = vrot.slane %v721, 2
      %v727 = vsel %vm673, %v724, %v726
      %728 = vrot.lane.b32.xlu0 %v723, 24
      %v729 = vpop.permute.xlu0 %728
      %730 = vrot.lane.b32.xlu0 %v680, 24
      %v731 = vpop.permute.xlu0 %730
      %732 = vrot.lane.b32.xlu0 %v682, 24
      %v733 = vpop.permute.xlu0 %732
      %734 = vrot.lane.b32.xlu0 %v684, 24
      %v735 = vpop.permute.xlu0 %734
      %736 = vrot.lane.b32.xlu0 %v686, 24
      %v737 = vpop.permute.xlu0 %736
      %738 = vrot.lane.b32.xlu0 %v688, 24
      %v739 = vpop.permute.xlu0 %738
      %740 = vrot.lane.b32.xlu0 %v690, 24
      %v741 = vpop.permute.xlu0 %740
      %742 = vrot.lane.b32.xlu0 %v725, 24
      %v743 = vpop.permute.xlu0 %742
      %744 = vrot.lane.b32.xlu0 %v727, 24
      %v745 = vpop.permute.xlu0 %744
      %v747 = vunpack.c.l.b16 %v373
      %v748 = vpack.c.b16 %v747, %v747
      %vm749 = vsmask.f32 5376
      %v751 = vshrl.u32 %v719, 16
      %v753 = vrot.slane %v751, 2
      %v754 = vshll.u32 %v719, 16
      %v756 = vrot.slane %v754, 3
      %v757 = vor.u32 %v753, %v756
      %v758 = vrot.slane %v452, 2
      %v759 = vrot.slane %v448, 3
      %v760 = vor.u32 %v758, %v759
      %v761 = vsel %vm749, %v757, %v760
      %v762 = vrot.slane %v460, 2
      %v763 = vrot.slane %v456, 3
      %v764 = vor.u32 %v762, %v763
      %v765 = vsel %vm749, %v760, %v764
      %v766 = vrot.slane %v468, 2
      %v767 = vrot.slane %v464, 3
      %v768 = vor.u32 %v766, %v767
      %v769 = vsel %vm749, %v764, %v768
      %v770 = vrot.slane %v476, 2
      %v771 = vrot.slane %v472, 3
      %v772 = vor.u32 %v770, %v771
      %v773 = vsel %vm749, %v768, %v772
      %v774 = vrot.slane %v484, 2
      %v775 = vrot.slane %v480, 3
      %v776 = vor.u32 %v774, %v775
      %v777 = vsel %vm749, %v772, %v776
      %v778 = vrot.slane %v492, 2
      %v779 = vrot.slane %v488, 3
      %v780 = vor.u32 %v778, %v779
      %v781 = vsel %vm749, %v776, %v780
      %v782 = vrot.slane %v635, 2
      %v783 = vrot.slane %v638, 3
      %v784 = vor.u32 %v782, %v783
      %v785 = vsel %vm749, %v780, %v784
      %v787 = vshrl.u32 %v720, 16
      %v789 = vrot.slane %v787, 2
      %v790 = vshll.u32 %v720, 16
      %v792 = vrot.slane %v790, 3
      %v793 = vor.u32 %v789, %v792
      %v794 = vsel %vm749, %v784, %v793
      %v796 = vshrl.u32 %v748, 16
      %v798 = vrot.slane %v796, 2
      %v799 = vshll.u32 %v748, 16
      %v801 = vrot.slane %v799, 3
      %v802 = vor.u32 %v798, %v801
      %v803 = vsel %vm749, %v793, %v802
      %804 = vrot.lane.b32.xlu0 %v761, 28
      %v805 = vpop.permute.xlu0 %804
      %806 = vrot.lane.b32.xlu0 %v765, 28
      %v807 = vpop.permute.xlu0 %806
      %808 = vrot.lane.b32.xlu0 %v769, 28
      %v809 = vpop.permute.xlu0 %808
      %810 = vrot.lane.b32.xlu0 %v773, 28
      %v811 = vpop.permute.xlu0 %810
      %812 = vrot.lane.b32.xlu0 %v777, 28
      %v813 = vpop.permute.xlu0 %812
      %814 = vrot.lane.b32.xlu0 %v781, 28
      %v815 = vpop.permute.xlu0 %814
      %816 = vrot.lane.b32.xlu0 %v785, 28
      %v817 = vpop.permute.xlu0 %816
      %818 = vrot.lane.b32.xlu0 %v794, 28
      %v819 = vpop.permute.xlu0 %818
      %820 = vrot.lane.b32.xlu0 %v803, 28
      %v821 = vpop.permute.xlu0 %820
      %v823 = vunpack.c.l.b16 %v374
      %v824 = vpack.c.b16 %v398, %v823
      %vm825 = vcmask 1044480
      %v826 = vrot.slane %v824, 3
      %v827 = vrot.slane %v414, 3
      %v828 = vsel %vm825, %v826, %v827
      %v829 = vrot.slane %v415, 3
      %v830 = vsel %vm825, %v827, %v829
      %v831 = vrot.slane %v416, 3
      %v832 = vsel %vm825, %v829, %v831
      %v833 = vrot.slane %v417, 3
      %v834 = vsel %vm825, %v831, %v833
      %v835 = vrot.slane %v418, 3
      %v836 = vsel %vm825, %v833, %v835
      %v837 = vrot.slane %v419, 3
      %v838 = vsel %vm825, %v835, %v837
      %v839 = vrot.slane %v568, 3
      %v840 = vsel %vm825, %v837, %v839
      %v841 = vrot.slane %v720, 3
      %v842 = vsel %vm825, %v839, %v841
      %v843 = vrot.slane %v748, 3
      %v844 = vsel %vm825, %v841, %v843
      %845 = vrot.lane.b32.xlu0 %v828, 32
      %v846 = vpop.permute.xlu0 %845
      %847 = vrot.lane.b32.xlu0 %v830, 32
      %v848 = vpop.permute.xlu0 %847
      %849 = vrot.lane.b32.xlu0 %v832, 32
      %v850 = vpop.permute.xlu0 %849
      %851 = vrot.lane.b32.xlu0 %v834, 32
      %v852 = vpop.permute.xlu0 %851
      %853 = vrot.lane.b32.xlu0 %v836, 32
      %v854 = vpop.permute.xlu0 %853
      %855 = vrot.lane.b32.xlu0 %v838, 32
      %v856 = vpop.permute.xlu0 %855
      %857 = vrot.lane.b32.xlu0 %v840, 32
      %v858 = vpop.permute.xlu0 %857
      %859 = vrot.lane.b32.xlu0 %v842, 32
      %v860 = vpop.permute.xlu0 %859
      %861 = vrot.lane.b32.xlu0 %v844, 32
      %v862 = vpop.permute.xlu0 %861
      %vm863 = vcmask 31744
      %v865 = vsel %vm863, %v411, %v501
      %v867 = vsel %vm863, %v412, %v503
      %v869 = vsel %vm863, %v413, %v505
      %v871 = vsel %vm863, %v414, %v507
      %v873 = vsel %vm863, %v415, %v509
      %v875 = vsel %vm863, %v416, %v511
      %v877 = vsel %vm863, %v417, %v513
      %v879 = vsel %vm863, %v418, %v515
      %v881 = vsel %vm863, %v419, %v517
      %vm882 = vcmask 64512
      %v884 = vsel %vm882, %v865, %v542
      %v886 = vsel %vm882, %v867, %v544
      %v888 = vsel %vm882, %v869, %v546
      %v890 = vsel %vm882, %v871, %v548
      %v892 = vsel %vm882, %v873, %v550
      %v894 = vsel %vm882, %v875, %v552
      %v896 = vsel %vm882, %v877, %v554
      %v898 = vsel %vm882, %v879, %v556
      %v900 = vsel %vm882, %v881, %v558
      %vm901 = vcmask 97280
      %v903 = vsel %vm901, %v884, %v577
      %v905 = vsel %vm901, %v886, %v579
      %v907 = vsel %vm901, %v888, %v581
      %v909 = vsel %vm901, %v890, %v583
      %v911 = vsel %vm901, %v892, %v585
      %v913 = vsel %vm901, %v894, %v587
      %v915 = vsel %vm901, %v896, %v589
      %v917 = vsel %vm901, %v898, %v591
      %v919 = vsel %vm901, %v900, %v593
      %vm920 = vcmask 130048
      %v922 = vsel %vm920, %v903, %v653
      %v924 = vsel %vm920, %v905, %v655
      %v926 = vsel %vm920, %v907, %v657
      %v928 = vsel %vm920, %v909, %v659
      %v930 = vsel %vm920, %v911, %v661
      %v932 = vsel %vm920, %v913, %v663
      %v934 = vsel %vm920, %v915, %v665
      %v936 = vsel %vm920, %v917, %v667
      %v938 = vsel %vm920, %v919, %v669
      %vm939 = vcmask 162816
      %v941 = vsel %vm939, %v922, %v694
      %v943 = vsel %vm939, %v924, %v696
      %v945 = vsel %vm939, %v926, %v698
      %v947 = vsel %vm939, %v928, %v700
      %v949 = vsel %vm939, %v930, %v702
      %v951 = vsel %vm939, %v932, %v704
      %v953 = vsel %vm939, %v934, %v706
      %v955 = vsel %vm939, %v936, %v708
      %v957 = vsel %vm939, %v938, %v710
      %vm958 = vcmask 195584
      %v960 = vsel %vm958, %v941, %v729
      %v962 = vsel %vm958, %v943, %v731
      %v964 = vsel %vm958, %v945, %v733
      %v966 = vsel %vm958, %v947, %v735
      %v968 = vsel %vm958, %v949, %v737
      %v970 = vsel %vm958, %v951, %v739
      %v972 = vsel %vm958, %v953, %v741
      %v974 = vsel %vm958, %v955, %v743
      %v976 = vsel %vm958, %v957, %v745
      %vm977 = vcmask 228352
      %v979 = vsel %vm977, %v960, %v805
      %v981 = vsel %vm977, %v962, %v807
      %v983 = vsel %vm977, %v964, %v809
      %v985 = vsel %vm977, %v966, %v811
      %v987 = vsel %vm977, %v968, %v813
      %v989 = vsel %vm977, %v970, %v815
      %v991 = vsel %vm977, %v972, %v817
      %v993 = vsel %vm977, %v974, %v819
      %v995 = vsel %vm977, %v976, %v821
      %vm996 = vcmask 261120
      %v998 = vsel %vm996, %v979, %v846
      %v1000 = vsel %vm996, %v981, %v848
      %v1002 = vsel %vm996, %v983, %v850
      %v1004 = vsel %vm996, %v985, %v852
      %v1006 = vsel %vm996, %v987, %v854
      %v1008 = vsel %vm996, %v989, %v856
      %v1010 = vsel %vm996, %v991, %v858
      %v1012 = vsel %vm996, %v993, %v860
      %v1014 = vsel %vm996, %v995, %v862
      %v1015 = vld [vmem:[%s2] sm:$0xf]
      %v1016 = vld [vmem:[%s2 + $0x4] sm:$0xf]
      %v1017 = vld [vmem:[%s2 + $0x8] sm:$0xf]
      %v1018 = vld [vmem:[%s2 + $0xc] sm:$0xf]
      %v1019 = vld [vmem:[%s2 + $0x10] sm:$0x3]
      %v1020 = vld [vmem:[%s3] sm:$0x1]
      %v1022 = vperm.slane %v1020, 0
      %v1029 = vunpack.c.l.b16 %v1015
      %v1030 = vunpack.c.l.b16 %v1016
      %v1031 = vunpack.c.l.b16 %v1017
      %v1032 = vunpack.c.l.b16 %v1018
      %v1033 = vunpack.c.l.b16 %v1019
      %v1034 = vpack.c.b16 %v1030, %v1029
      %v1035 = vpack.c.b16 %v1032, %v1031
      %v1036 = vpack.c.b16 %v1033, %v1033
      %vm1039 = vcmask 293888
      %v1040 = vsel %vm1039, %v998, 0
      %v1042 = vsel %vm1039, %v1000, 0
      %v1044 = vsel %vm1039, %v1002, 0
      %v1046 = vsel %vm1039, %v1004, 0
      %v1048 = vsel %vm1039, %v1006, 0
      %v1050 = vsel %vm1039, %v1008, 0
      %v1052 = vsel %vm1039, %v1010, 0
      %v1054 = vsel %vm1039, %v1012, 0
      %v1056 = vsel %vm1039, %v1014, 0
      %vm1058 = vcmask 1041408
      %v1060 = vsel %vm1058, %v1036, 0
      %1062 = vmatpush.bf16.msra.mxu0 0
      %1063 = vmatpush.bf16.msra.mxu0 0
      %1064 = vmatpush.bf16.msra.mxu0 0
      %1065 = vmatpush.bf16.msra.mxu0 0
      %1066 = vmatpush.bf16.msra.mxu0 0
      %1067 = vmatpush.bf16.msra.mxu0 %v1060
      %1068 = vmatpush.bf16.msra.mxu0 %v1035
      %1069 = vmatpush.bf16.msra.mxu0 %v1034
      %1070 = vmatmul.bf16.gmra.mxu0 %v1040
      %v1071 = vpop.f32.mrf.mxu0
      %v1072 = vadd.f32 %v1022, %v1071
      %v1073 = vpop.f32.mrf.mxu0
      %v1074 = vadd.f32 %v1022, %v1073
      %1075 = vmatmul.bf16.gmra.mxu0 %v1042
      %v1076 = vpop.f32.mrf.mxu0
      %v1077 = vadd.f32 %v1022, %v1076
      %v1078 = vpop.f32.mrf.mxu0
      %v1079 = vadd.f32 %v1022, %v1078
      %1080 = vmatmul.bf16.gmra.mxu0 %v1044
      %v1081 = vpop.f32.mrf.mxu0
      %v1082 = vadd.f32 %v1022, %v1081
      %v1083 = vpop.f32.mrf.mxu0
      %v1084 = vadd.f32 %v1022, %v1083
      %1085 = vmatmul.bf16.gmra.mxu0 %v1046
      %v1086 = vpop.f32.mrf.mxu0
      %v1087 = vadd.f32 %v1022, %v1086
      %v1088 = vpop.f32.mrf.mxu0
      %v1089 = vadd.f32 %v1022, %v1088
      %1090 = vmatmul.bf16.gmra.mxu0 %v1048
      %v1091 = vpop.f32.mrf.mxu0
      %v1092 = vadd.f32 %v1022, %v1091
      %v1093 = vpop.f32.mrf.mxu0
      %v1094 = vadd.f32 %v1022, %v1093
      %1095 = vmatmul.bf16.gmra.mxu0 %v1050
      %v1096 = vpop.f32.mrf.mxu0
      %v1097 = vadd.f32 %v1022, %v1096
      %v1098 = vpop.f32.mrf.mxu0
      %v1099 = vadd.f32 %v1022, %v1098
      %1100 = vmatmul.bf16.gmra.mxu0 %v1052
      %v1101 = vpop.f32.mrf.mxu0
      %v1102 = vadd.f32 %v1022, %v1101
      %v1103 = vpop.f32.mrf.mxu0
      %v1104 = vadd.f32 %v1022, %v1103
      %1105 = vmatmul.bf16.gmra.mxu0 %v1054
      %v1106 = vpop.f32.mrf.mxu0
      %v1107 = vadd.f32 %v1022, %v1106
      %v1108 = vpop.f32.mrf.mxu0
      %v1109 = vadd.f32 %v1022, %v1108
      %1110 = vmatmul.bf16.gmra.mxu0 %v1056
      %v1111 = vpop.f32.mrf.mxu0
      %v1112 = vadd.f32 %v1022, %v1111
      %v1113 = vpop.f32.mrf.mxu0
      %v1114 = vadd.f32 %v1022, %v1113
      %1115 = vdwg.mxu0
      %1116 = vst [vmem:[%s285] sm:$0xff] %v1072
      %1117 = vst [vmem:[%s285 + $0x8] sm:$0xff] %v1074
      %1118 = vst [vmem:[%s285 + $0x10] sm:$0xff] %v1077
      %1119 = vst [vmem:[%s285 + $0x18] sm:$0xff] %v1079
      %1120 = vst [vmem:[%s285 + $0x20] sm:$0xff] %v1082
      %1121 = vst [vmem:[%s285 + $0x28] sm:$0xff] %v1084
      %1122 = vst [vmem:[%s285 + $0x30] sm:$0xff] %v1087
      %1123 = vst [vmem:[%s285 + $0x38] sm:$0xff] %v1089
      %1124 = vst [vmem:[%s285 + $0x40] sm:$0xff] %v1092
      %1125 = vst [vmem:[%s285 + $0x48] sm:$0xff] %v1094
      %1126 = vst [vmem:[%s285 + $0x50] sm:$0xff] %v1097
      %1127 = vst [vmem:[%s285 + $0x58] sm:$0xff] %v1099
      %1128 = vst [vmem:[%s285 + $0x60] sm:$0xff] %v1102
      %1129 = vst [vmem:[%s285 + $0x68] sm:$0xff] %v1104
      %1130 = vst [vmem:[%s285 + $0x70] sm:$0xff] %v1107
      %1131 = vst [vmem:[%s285 + $0x78] sm:$0xff] %v1109
      %1132 = vst [vmem:[%s285 + $0x80] sm:$0xff] %v1112
      %1133 = vst [vmem:[%s285 + $0x88] sm:$0xff] %v1114
      %s1134 = smul.u32 18, %s20
      %p1135 = scmp.lt.s32.totalorder %s19, 1
      %s1136 = scalar_select %p1135, %s19, 1
      %p1137 = scmp.lt.s32.totalorder %s1134, 35
      %s1138 = scalar_select %p1137, %s1134, 35
      %s1139 = smul.addr %s1136, 36
      %s1140 = sadd.s32 %s1138, %s1139
      %s1141 = smul.addr %s1140, 8
      %s1142 = scalar_lea.vmem %s4, %s1141
      // Predicated region
      $region37: #{sparse_conv2d_forward.1} parent=35 // pred_check
        %p1143 = pneg %p149
      $region38: #{sparse_conv2d_forward.1} parent=35 // pred_check_branch
        %1145 = sbr.rel (%p1143) target = $region40
      $region39: #{sparse_conv2d_forward.1} parent=35 // pred_region
        %s1146 = smul.u32 18, %s20
      $region40: #{sparse_conv2d_forward.1} parent=35 // pred_fallthru
        _
    $region36: #{sparse_conv2d_forward.1} parent=5 // pred_fallthru
      _
    %p1147 = scmp.le.s32.totalorder 2, %s10
    // Predicated region
    $region41: #{sparse_conv2d_forward.1} parent=5 // pred_check
      %p1148 = pneg %p1147
    $region42: #{sparse_conv2d_forward.1} parent=5 // pred_check_branch
      %1150 = sbr.rel (%p1148) target = $region44
    $region43: #{sparse_conv2d_forward.1} parent=5 // pred_region
      %s1151 = ssub.s32 %s10, 2
      // Predicated region
      $region45: #{sparse_conv2d_forward.1} parent=43 // pred_check
        %p1152 = pneg %p155
      $region46: #{sparse_conv2d_forward.1} parent=43 // pred_check_branch
        %1154 = sbr.rel (%p1152) target = $region48
      $region47: #{sparse_conv2d_forward.1} parent=43 // pred_region
        %s1155 = smul.u32 18, %s22
        %p1156 = scmp.lt.s32.totalorder %s21, 1
        %s1157 = scalar_select %p1156, %s21, 1
        %p1158 = scmp.lt.s32.totalorder %s1155, 35
        %s1159 = scalar_select %p1158, %s1155, 35
        %s1160 = smul.addr %s1157, 36
        %s1161 = sadd.s32 %s1159, %s1160
        %s1162 = smul.addr %s1161, 8
        %s1163 = scalar_lea.vmem %s4, %s1162
      $region48: #{sparse_conv2d_forward.1} parent=43 // pred_fallthru
        _
    $region44: #{sparse_conv2d_forward.1} parent=5 // pred_fallthru
      _
  $region6: #{sparse_conv2d_forward.1} parent=0 // loop_footer
    %s14 = sadd.s32 1, %s10
  $region7: #{sparse_conv2d_forward.1} parent=0 // loop_footer_branch
    %9 = sbr.rel target = $region3
  $region8: #{sparse_conv2d_forward.1} parent=0 // loop_exit
    _

</llo_original>
